<compile_context>
chip_gen: v5e
topology: v5e:2x2
jax: 0.10.0
libtpu: 0.0.40
codegen_flags: <defaults>
</compile_context>

<pallas_src>
import functools
import math

import numpy as np

import jax
import jax.numpy as jnp
from jax.experimental import pallas as pl
from jax.experimental.pallas import tpu as pltpu

SCALING_FACTOR = 0.18215

_CONV_TILE_ELEMS = 1 << 20   # target rows*max(C) elements per conv spatial tile
_GN_TILE_ELEMS = 1 << 21     # target rows*C elements per GroupNorm stats tile


def _vmem_limit():
    try:
        info = pltpu.get_tpu_info()
        cap = getattr(info, "vmem_capacity_bytes", None)
        if cap:
            return int(cap) * 3 // 4
    except Exception:
        pass
    return 64 * 1024 * 1024


VMEM_LIMIT = _vmem_limit()


def _pick_tile(total, target, mult=1):
    """Largest divisor of `total` that is <= target and a multiple of `mult` (or total)."""
    t = min(total, max(mult, target))
    t -= t % mult
    while t > 0 and total % t != 0:
        t -= mult
    return t if t > 0 else total


# ----------------------------------------------------------------------------
# 3x3 conv kernel: halo row-band slab -> 9 shifted taps -> 9 MXU matmuls.
# Optionally fuses GroupNorm-apply + SiLU on the input and a residual add on the output.
# ----------------------------------------------------------------------------
def _make_conv3_kernel(TH, W, H, Cin, Cout, with_norm, with_res):
    THp, Wp = TH + 2, W + 2

    def compute(x_ref, w_ref, b_ref, nsc_ref, nsh_ref, res_ref, o_ref):
        x = x_ref[0]                                        # (THp, Wp, Cin) bf16
        if with_norm:
            # y = x*scale + shift ; SiLU ; then zero the conv zero-padding border
            xf = x.astype(jnp.float32) * nsc_ref[0] + nsh_ref[0]
            xf = xf * jax.nn.sigmoid(xf)
            i = pl.program_id(1)
            row = jax.lax.broadcasted_iota(jnp.int32, (THp, Wp), 0) + i * TH
            col = jax.lax.broadcasted_iota(jnp.int32, (THp, Wp), 1)
            interior = (row >= 1) & (row <= H) & (col >= 1) & (col <= W)
            xf = jnp.where(interior[:, :, None], xf, 0.0)
            x = xf.astype(jnp.bfloat16)
        acc = None
        for kh in range(3):
            for kw in range(3):
                tap = x[kh:kh + TH, kw:kw + W, :].reshape(TH * W, Cin)
                d = jnp.dot(tap, w_ref[kh * 3 + kw],
                            preferred_element_type=jnp.float32)
                acc = d if acc is None else acc + d
        acc = acc + b_ref[...]
        if with_res:
            acc = acc + res_ref[0].astype(jnp.float32)
        o_ref[0] = acc.astype(o_ref.dtype)

    if with_norm and with_res:
        def kernel(x_ref, w_ref, b_ref, nsc_ref, nsh_ref, res_ref, o_ref):
            compute(x_ref, w_ref, b_ref, nsc_ref, nsh_ref, res_ref, o_ref)
    elif with_norm:
        def kernel(x_ref, w_ref, b_ref, nsc_ref, nsh_ref, o_ref):
            compute(x_ref, w_ref, b_ref, nsc_ref, nsh_ref, None, o_ref)
    elif with_res:
        def kernel(x_ref, w_ref, b_ref, res_ref, o_ref):
            compute(x_ref, w_ref, b_ref, None, None, res_ref, o_ref)
    else:
        def kernel(x_ref, w_ref, b_ref, o_ref):
            compute(x_ref, w_ref, b_ref, None, None, None, o_ref)
    return kernel


@functools.lru_cache(maxsize=None)
def _conv3_call(B, H, W, Cin, Cout, TH, with_norm, with_res):
    n_h = H // TH
    THp, Wp, HWt = TH + 2, W + 2, TH * W
    kernel = _make_conv3_kernel(TH, W, H, Cin, Cout, with_norm, with_res)
    in_specs = [
        # halo slabs, leading (B, n_h) merged -> 4D block
        pl.BlockSpec((1, THp, Wp, Cin), lambda b, i: (b * n_h + i, 0, 0, 0)),
        # full 3x3 weight resident in VMEM
        pl.BlockSpec((9, Cin, Cout), lambda b, i: (0, 0, 0)),
        pl.BlockSpec((1, Cout), lambda b, i: (0, 0)),
    ]
    if with_norm:
        in_specs.append(pl.BlockSpec((1, 1, Cin), lambda b, i: (b, 0, 0)))   # scale
        in_specs.append(pl.BlockSpec((1, 1, Cin), lambda b, i: (b, 0, 0)))   # shift
    if with_res:
        in_specs.append(pl.BlockSpec((1, HWt, Cout), lambda b, i: (b, i, 0)))
    fn = pl.pallas_call(
        kernel,
        out_shape=jax.ShapeDtypeStruct((B, H * W, Cout), jnp.bfloat16),
        grid_spec=pltpu.PrefetchScalarGridSpec(
            num_scalar_prefetch=0,
            grid=(B, n_h),
            in_specs=in_specs,
            out_specs=pl.BlockSpec((1, HWt, Cout), lambda b, i: (b, i, 0)),
        ),
        compiler_params=pltpu.CompilerParams(
            dimension_semantics=("parallel", "parallel"),
            vmem_limit_bytes=VMEM_LIMIT),
    )
    return jax.jit(fn)


# ----------------------------------------------------------------------------
# 1x1 conv (post_quant_conv, resnet shortcut) = tiled matmul.
# ----------------------------------------------------------------------------
@functools.lru_cache(maxsize=None)
def _conv1_call(B, HW, Cin, Cout, TM):
    def kernel(x_ref, w_ref, b_ref, o_ref):
        acc = jnp.dot(x_ref[0], w_ref[...],
                      preferred_element_type=jnp.float32) + b_ref[...]
        o_ref[0] = acc.astype(o_ref.dtype)

    fn = pl.pallas_call(
        kernel,
        out_shape=jax.ShapeDtypeStruct((B, HW, Cout), jnp.bfloat16),
        grid_spec=pltpu.PrefetchScalarGridSpec(
            num_scalar_prefetch=0,
            grid=(B, HW // TM),
            in_specs=[pl.BlockSpec((1, TM, Cin), lambda b, i: (b, i, 0)),
                      pl.BlockSpec((Cin, Cout), lambda b, i: (0, 0)),
                      pl.BlockSpec((1, Cout), lambda b, i: (0, 0))],
            out_specs=pl.BlockSpec((1, TM, Cout), lambda b, i: (b, i, 0)),
        ),
        compiler_params=pltpu.CompilerParams(
            dimension_semantics=("parallel", "parallel"),
            vmem_limit_bytes=VMEM_LIMIT),
    )
    return jax.jit(fn)


# ----------------------------------------------------------------------------
# GroupNorm(32) statistics: tiled sum/sumsq accumulation -> per-channel scale/shift.
# (The normalize + SiLU apply is fused into the consumer conv / qkv kernel.)
# ----------------------------------------------------------------------------
def _make_gn_stats_kernel(C, eps):
    def kernel(x_ref, G_ref, g_ref, b_ref, sc_ref, sh_ref, sum_ref, sq_ref):
        i = pl.program_id(1)

        @pl.when(i == 0)
        def _():
            sum_ref[...] = jnp.zeros((1, C), jnp.float32)
            sq_ref[...] = jnp.zeros((1, C), jnp.float32)

        x = x_ref[0].astype(jnp.float32)                    # (TM, C)
        sum_ref[...] = sum_ref[...] + jnp.sum(x, axis=0, keepdims=True)
        sq_ref[...] = sq_ref[...] + jnp.sum(x * x, axis=0, keepdims=True)

        @pl.when(i == pl.num_programs(1) - 1)
        def _():
            # G already contains the 1/(HW*cpg) normalization and group membership.
            gmean = jnp.dot(sum_ref[...], G_ref[...],
                            preferred_element_type=jnp.float32)
            gmsq = jnp.dot(sq_ref[...], G_ref[...],
                           preferred_element_type=jnp.float32)
            var = jnp.maximum(gmsq - gmean * gmean, 0.0)
            inv = jax.lax.rsqrt(var + eps)
            scale = g_ref[...] * inv
            sc_ref[0] = scale
            sh_ref[0] = b_ref[...] - gmean * scale
    return kernel


@functools.lru_cache(maxsize=None)
def _gn_stats_call(B, HW, C, TM, eps):
    kernel = _make_gn_stats_kernel(C, eps)
    fn = pl.pallas_call(
        kernel,
        out_shape=(jax.ShapeDtypeStruct((B, 1, C), jnp.float32),
                   jax.ShapeDtypeStruct((B, 1, C), jnp.float32)),
        grid_spec=pltpu.PrefetchScalarGridSpec(
            num_scalar_prefetch=0,
            grid=(B, HW // TM),
            in_specs=[pl.BlockSpec((1, TM, C), lambda b, i: (b, i, 0)),
                      pl.BlockSpec((C, C), lambda b, i: (0, 0)),
                      pl.BlockSpec((1, C), lambda b, i: (0, 0)),
                      pl.BlockSpec((1, C), lambda b, i: (0, 0))],
            out_specs=[pl.BlockSpec((1, 1, C), lambda b, i: (b, 0, 0)),
                       pl.BlockSpec((1, 1, C), lambda b, i: (b, 0, 0))],
            scratch_shapes=[pltpu.VMEM((1, C), jnp.float32),
                            pltpu.VMEM((1, C), jnp.float32)]),
        compiler_params=pltpu.CompilerParams(
            dimension_semantics=("parallel", "arbitrary"),
            vmem_limit_bytes=VMEM_LIMIT),
    )
    return jax.jit(fn)


@functools.lru_cache(maxsize=None)
def _group_matrix(C, n):
    cpg = C // 32
    idx = np.arange(C) // cpg
    m = (idx[:, None] == idx[None, :]).astype(np.float32) / float(n)
    return jnp.asarray(m)


# ----------------------------------------------------------------------------
# VAE attention: (a) fused GroupNorm-apply + q/k/v projections, (b) flash-style
# online-softmax attention + out-projection + residual add.
# ----------------------------------------------------------------------------
@functools.lru_cache(maxsize=None)
def _qkv_call(B, S, C, TM):
    def kernel(x_ref, nsc_ref, nsh_ref, wq_ref, wk_ref, wv_ref,
               bq_ref, bk_ref, bv_ref, q_ref, k_ref, v_ref):
        xn = (x_ref[0].astype(jnp.float32) * nsc_ref[0] + nsh_ref[0]
              ).astype(jnp.bfloat16)
        q_ref[0] = (jnp.dot(xn, wq_ref[...], preferred_element_type=jnp.float32)
                    + bq_ref[...]).astype(q_ref.dtype)
        k_ref[0] = (jnp.dot(xn, wk_ref[...], preferred_element_type=jnp.float32)
                    + bk_ref[...]).astype(k_ref.dtype)
        v_ref[0] = (jnp.dot(xn, wv_ref[...], preferred_element_type=jnp.float32)
                    + bv_ref[...]).astype(v_ref.dtype)

    sd = jax.ShapeDtypeStruct((B, S, C), jnp.bfloat16)
    xspec = pl.BlockSpec((1, TM, C), lambda b, i: (b, i, 0))
    nspec = pl.BlockSpec((1, 1, C), lambda b, i: (b, 0, 0))
    wspec = pl.BlockSpec((C, C), lambda b, i: (0, 0))
    bspec = pl.BlockSpec((1, C), lambda b, i: (0, 0))
    fn = pl.pallas_call(
        kernel,
        out_shape=(sd, sd, sd),
        grid_spec=pltpu.PrefetchScalarGridSpec(
            num_scalar_prefetch=0,
            grid=(B, S // TM),
            in_specs=[xspec, nspec, nspec, wspec, wspec, wspec,
                      bspec, bspec, bspec],
            out_specs=[xspec, xspec, xspec]),
        compiler_params=pltpu.CompilerParams(
            dimension_semantics=("parallel", "parallel"),
            vmem_limit_bytes=VMEM_LIMIT),
    )
    return jax.jit(fn)


def _make_attn_kernel(C, TQ):
    scale = 1.0 / math.sqrt(C)

    def kernel(q_ref, k_ref, v_ref, res_ref, wo_ref, bo_ref, o_ref,
               m_ref, l_ref, acc_ref):
        kv = pl.program_id(2)

        @pl.when(kv == 0)
        def _():
            m_ref[...] = jnp.full((TQ, 1), -jnp.inf, jnp.float32)
            l_ref[...] = jnp.zeros((TQ, 1), jnp.float32)
            acc_ref[...] = jnp.zeros((TQ, C), jnp.float32)

        s = jax.lax.dot_general(q_ref[0], k_ref[0], (((1,), (1,)), ((), ())),
                                preferred_element_type=jnp.float32) * scale
        m_prev = m_ref[...]
        m_new = jnp.maximum(m_prev, jnp.max(s, axis=-1, keepdims=True))
        alpha = jnp.exp(m_prev - m_new)
        p = jnp.exp(s - m_new)
        l_ref[...] = alpha * l_ref[...] + jnp.sum(p, axis=-1, keepdims=True)
        acc_ref[...] = alpha * acc_ref[...] + jnp.dot(
            p.astype(jnp.bfloat16), v_ref[0], preferred_element_type=jnp.float32)
        m_ref[...] = m_new

        @pl.when(kv == pl.num_programs(2) - 1)
        def _():
            o = acc_ref[...] * pl.reciprocal(l_ref[...], approx=True)
            o = jnp.dot(o.astype(jnp.bfloat16), wo_ref[...],
                        preferred_element_type=jnp.float32) + bo_ref[...]
            o_ref[0] = (o + res_ref[0].astype(jnp.float32)).astype(o_ref.dtype)
    return kernel


@functools.lru_cache(maxsize=None)
def _attn_call(B, S, C, TQ, TKV):
    kernel = _make_attn_kernel(C, TQ)
    fn = pl.pallas_call(
        kernel,
        out_shape=jax.ShapeDtypeStruct((B, S, C), jnp.bfloat16),
        grid_spec=pltpu.PrefetchScalarGridSpec(
            num_scalar_prefetch=0,
            grid=(B, S // TQ, S // TKV),
            in_specs=[pl.BlockSpec((1, TQ, C), lambda b, qi, ki: (b, qi, 0)),
                      pl.BlockSpec((1, TKV, C), lambda b, qi, ki: (b, ki, 0)),
                      pl.BlockSpec((1, TKV, C), lambda b, qi, ki: (b, ki, 0)),
                      pl.BlockSpec((1, TQ, C), lambda b, qi, ki: (b, qi, 0)),
                      pl.BlockSpec((C, C), lambda b, qi, ki: (0, 0)),
                      pl.BlockSpec((1, C), lambda b, qi, ki: (0, 0))],
            out_specs=pl.BlockSpec((1, TQ, C), lambda b, qi, ki: (b, qi, 0)),
            scratch_shapes=[pltpu.VMEM((TQ, 1), jnp.float32),
                            pltpu.VMEM((TQ, 1), jnp.float32),
                            pltpu.VMEM((TQ, C), jnp.float32)]),
        compiler_params=pltpu.CompilerParams(
            dimension_semantics=("parallel", "parallel", "arbitrary"),
            vmem_limit_bytes=VMEM_LIMIT),
    )
    return jax.jit(fn)


# ----------------------------------------------------------------------------
# JAX glue
# ----------------------------------------------------------------------------
def group_norm_stats(x, gamma, beta, eps):
    """x: (B, HW, C) bf16 -> (scale, shift) each (B, 1, C) f32."""
    B, HW, C = x.shape
    TM = _pick_tile(HW, max(8, _GN_TILE_ELEMS // C), mult=8)
    G = _group_matrix(C, HW * (C // 32))
    return _gn_stats_call(B, HW, C, TM, float(eps))(
        x, G, gamma.reshape(1, C).astype(jnp.float32),
        beta.reshape(1, C).astype(jnp.float32))


def conv3x3(x, H, W, w, b, norm=None, residual=None, upsample=False):
    """x: (B, H*W, Cin) bf16; w: (9, Cin, Cout) bf16; b: (1, Cout) f32.
    norm: optional (scale, shift) from group_norm_stats (fused GN+SiLU on input).
    residual: optional (B, H*W, Cout) bf16 added to the output.
    upsample: nearest-2x before the conv (UpSampler)."""
    B, HW, Cin = x.shape
    Cout = w.shape[-1]
    x_img = x.reshape(B, H, W, Cin)
    if upsample:
        # TODO(synk): fuse the nearest-2x upsample into the conv kernel's tap generation
        # instead of materializing the 2x image once in the slab-building glue.
        x_img = jnp.broadcast_to(
            x_img[:, :, None, :, None, :], (B, H, 2, W, 2, Cin)
        ).reshape(B, 2 * H, 2 * W, Cin)
        H, W = 2 * H, 2 * W
    TH = _pick_tile(H, max(1, _CONV_TILE_ELEMS // (W * max(Cin, Cout))))
    n_h = H // TH
    # Build (TH+2)-row halo slabs (~(TH+2)/TH extra traffic instead of the old 9x im2col).
    slabs = []
    for i in range(n_h):
        lo, hi = i * TH - 1, i * TH + TH + 1
        slab = x_img[:, max(lo, 0):min(hi, H)]
        slab = jnp.pad(slab, ((0, 0),
                              (1 if lo < 0 else 0, 1 if hi > H else 0),
                              (1, 1), (0, 0)))
        slabs.append(slab)
    tiles = jnp.stack(slabs, axis=1).reshape(B * n_h, TH + 2, W + 2, Cin)
    args = [tiles, w, b]
    if norm is not None:
        args.extend([norm[0], norm[1]])
    if residual is not None:
        args.append(residual)
    out = _conv3_call(B, H, W, Cin, Cout, TH,
                      norm is not None, residual is not None)(*args)
    return out, H, W


def conv1x1(x, w, b):
    B, HW, Cin = x.shape
    Cout = w.shape[-1]
    TM = _pick_tile(HW, max(8, _CONV_TILE_ELEMS // max(Cin, Cout)), mult=8)
    return _conv1_call(B, HW, Cin, Cout, TM)(x, w, b)


def attention_block(x, blk):
    B, S, C = x.shape
    scale, shift = group_norm_stats(x, blk['n_g'], blk['n_b'], 1e-6)
    TM = _pick_tile(S, max(8, _CONV_TILE_ELEMS // C), mult=8)
    q, k, v = _qkv_call(B, S, C, TM)(x, scale, shift,
                                     blk['wq'], blk['wk'], blk['wv'],
                                     blk['bq'], blk['bk'], blk['bv'])
    TQ = _pick_tile(S, 512, mult=8)
    TKV = _pick_tile(S, 1024, mult=8)
    return _attn_call(B, S, C, TQ, TKV)(q, k, v, x, blk['wo'], blk['bo'])


# ----------------------------------------------------------------------------
# Deterministic synthetic parameters (same shapes / structure as the PyTorch module).
# ----------------------------------------------------------------------------
class _KeyGen:
    def __init__(self, key):
        self._key = key

    def __call__(self):
        self._key, sub = jax.random.split(self._key)
        return sub


def _normal(kg, shape, scale):
    return scale * jax.random.normal(kg(), shape, dtype=jnp.float32)


BLOCK_SPEC = [('res', 512, 512), ('attn', 512, 512), ('res', 512, 512), ('res', 512, 512),
              ('res', 512, 512), ('res', 512, 512), ('up', 512, 512), ('res', 512, 512),
              ('res', 512, 512), ('res', 512, 512), ('up', 512, 512), ('res', 512, 256),
              ('res', 256, 256), ('res', 256, 256), ('up', 256, 256), ('res', 256, 128),
              ('res', 128, 128), ('res', 128, 128)]


def init_params(key):
    kg = _KeyGen(key)
    P = {}
    # post_quant_conv: Conv2d(4, 4, k=1); 1/scaling_factor folded into the weight; pad to 128.
    w = _normal(kg, (4, 4), 0.5) / SCALING_FACTOR
    P['post_quant_w'] = jnp.zeros((128, 128), jnp.float32).at[:4, :4].set(w).astype(jnp.bfloat16)
    P['post_quant_b'] = jnp.zeros((1, 128), jnp.float32).at[0, :4].set(_normal(kg, (4,), 0.02))
    # conv_in: Conv2d(4, 512, k=3, p=1); pad Cin 4 -> 128.
    w = _normal(kg, (9, 4, 512), 1.0 / math.sqrt(36))
    P['conv_in_w'] = jnp.zeros((9, 128, 512), jnp.float32).at[:, :4, :].set(w).astype(jnp.bfloat16)
    P['conv_in_b'] = _normal(kg, (512,), 0.02).reshape(1, 512)

    blocks = []
    for bt, cin, cout in BLOCK_SPEC:
        if bt == 'res':
            blk = {'type': 'res',
                   'n1_g': 1.0 + _normal(kg, (cin,), 0.1), 'n1_b': _normal(kg, (cin,), 0.1),
                   'c1_w': _normal(kg, (9, cin, cout), 1.0 / math.sqrt(9 * cin)).astype(jnp.bfloat16),
                   'c1_b': _normal(kg, (cout,), 0.02).reshape(1, cout),
                   'n2_g': 1.0 + _normal(kg, (cout,), 0.1), 'n2_b': _normal(kg, (cout,), 0.1),
                   'c2_w': _normal(kg, (9, cout, cout), 1.0 / math.sqrt(9 * cout)).astype(jnp.bfloat16),
                   'c2_b': _normal(kg, (cout,), 0.02).reshape(1, cout)}
            if cin != cout:
                blk['sc_w'] = _normal(kg, (cin, cout), 1.0 / math.sqrt(cin)).astype(jnp.bfloat16)
                blk['sc_b'] = _normal(kg, (cout,), 0.02).reshape(1, cout)
        elif bt == 'attn':
            c = cin
            blk = {'type': 'attn',
                   'n_g': 1.0 + _normal(kg, (c,), 0.1), 'n_b': _normal(kg, (c,), 0.1)}
            for nm in ('q', 'k', 'v', 'o'):
                blk['w' + nm] = _normal(kg, (c, c), 1.0 / math.sqrt(c)).astype(jnp.bfloat16)
                blk['b' + nm] = _normal(kg, (c,), 0.02).reshape(1, c)
        else:  # UpSampler
            blk = {'type': 'up',
                   'w': _normal(kg, (9, cin, cout), 1.0 / math.sqrt(9 * cin)).astype(jnp.bfloat16),
                   'b': _normal(kg, (cout,), 0.02).reshape(1, cout)}
        blocks.append(blk)
    P['blocks'] = blocks

    P['out_norm_g'] = 1.0 + _normal(kg, (128,), 0.1)
    P['out_norm_b'] = _normal(kg, (128,), 0.1)
    # conv_out: Conv2d(128, 3, k=3, p=1); pad Cout 3 -> 128.
    w = _normal(kg, (9, 128, 3), 1.0 / math.sqrt(9 * 128))
    P['conv_out_w'] = jnp.zeros((9, 128, 128), jnp.float32).at[:, :, :3].set(w).astype(jnp.bfloat16)
    P['conv_out_b'] = jnp.zeros((1, 128), jnp.float32).at[0, :3].set(_normal(kg, (3,), 0.02))
    return P


# ----------------------------------------------------------------------------
# Forward pass (semantics of SDVAEDecoder.forward, tiled=False)
# ----------------------------------------------------------------------------
def sd_vae_decoder_forward(sample, params):
    # sample: NCHW [B, 4, H, W]
    orig_dtype = sample.dtype
    B, Cin0, H, W = sample.shape
    x = jnp.transpose(sample, (0, 2, 3, 1)).reshape(B, H * W, Cin0)
    x = jnp.pad(x, ((0, 0), (0, 0), (0, 128 - Cin0))).astype(jnp.bfloat16)

    # (sample / scaling_factor) then post_quant_conv; 1/sf folded into the weight.
    x = conv1x1(x, params['post_quant_w'], params['post_quant_b'])
    x, H, W = conv3x3(x, H, W, params['conv_in_w'], params['conv_in_b'])

    for blk in params['blocks']:
        t = blk['type']
        if t == 'res':
            ss1 = group_norm_stats(x, blk['n1_g'], blk['n1_b'], 1e-6)
            h, _, _ = conv3x3(x, H, W, blk['c1_w'], blk['c1_b'], norm=ss1)
            ss2 = group_norm_stats(h, blk['n2_g'], blk['n2_b'], 1e-6)
            res = conv1x1(x, blk['sc_w'], blk['sc_b']) if 'sc_w' in blk else x
            x, _, _ = conv3x3(h, H, W, blk['c2_w'], blk['c2_b'], norm=ss2, residual=res)
        elif t == 'attn':
            x = attention_block(x, blk)
        else:  # UpSampler: nearest-2x + 3x3 conv
            x, H, W = conv3x3(x, H, W, blk['w'], blk['b'], upsample=True)

    ss = group_norm_stats(x, params['out_norm_g'], params['out_norm_b'], 1e-5)
    x, _, _ = conv3x3(x, H, W, params['conv_out_w'], params['conv_out_b'], norm=ss)
    x = x.reshape(B, H, W, 128)[..., :3]                       # drop output-channel padding
    return jnp.transpose(x, (0, 3, 1, 2)).astype(orig_dtype)   # -> NCHW

# TODO(synk): tiled_forward / TileWorker spatial tiling path (tiled=True) is not implemented.


if __name__ == "__main__":
    sample = jax.random.normal(jax.random.PRNGKey(0), (2, 4, 16, 16), dtype=jnp.float32)
    params = init_params(jax.random.PRNGKey(42))

    out = sd_vae_decoder_forward(sample, params)
    out = jax.block_until_ready(out)

    assert out.shape == (2, 3, 128, 128), out.shape
    assert bool(jnp.isfinite(out).all())
    print("KERNEL_OK")
</pallas_src>

<mosaic_0001>
module attributes {stable_mosaic.version = 11 : i64} {
  func.func @kernel(%arg0: i32, %arg1: i32, %arg2: memref<1x256x128xbf16, #tpu.memory_space<vmem>>, %arg3: memref<128x128xbf16, #tpu.memory_space<vmem>>, %arg4: memref<1x128xf32, #tpu.memory_space<vmem>>, %arg5: memref<1x256x128xbf16, #tpu.memory_space<vmem>>) attributes {dimension_semantics = [#tpu.dimension_semantics<parallel>, #tpu.dimension_semantics<parallel>], iteration_bounds = array<i64: 2, 1>, scalar_prefetch = 0 : i64, scratch_operands = 0 : i64, tpu.core_type = #tpu.core_type<tc>, window_params = [{transform_indices = @transform_0, window_bounds = array<i64: 1, 256, 128>}, {pipeline_mode = #tpu.pipeline_mode<synchronous>, transform_indices = @transform_1, window_bounds = array<i64: 128, 128>}, {pipeline_mode = #tpu.pipeline_mode<synchronous>, transform_indices = @transform_2, window_bounds = array<i64: 1, 128>}, {transform_indices = @transform_3, window_bounds = array<i64: 1, 256, 128>}]} {
    %c0 = arith.constant 0 : index
    %c0_0 = arith.constant 0 : index
    %c0_1 = arith.constant 0 : index
    %0 = vector.load %arg2[%c0, %c0_0, %c0_1] : memref<1x256x128xbf16, #tpu.memory_space<vmem>>, vector<1x256x128xbf16>
    %1 = vector.shape_cast %0 : vector<1x256x128xbf16> to vector<256x128xbf16>
    %c0_2 = arith.constant 0 : index
    %c0_3 = arith.constant 0 : index
    %2 = vector.load %arg3[%c0_2, %c0_3] : memref<128x128xbf16, #tpu.memory_space<vmem>>, vector<128x128xbf16>
    %cst = arith.constant dense<0.000000e+00> : vector<256x128xf32>
    %3 = tpu.matmul %1, %2, %cst {dimension_numbers = #tpu.dot_dimension_numbers<[1], [0], [0], [1], [0, 0, 1, 1], [], []>} : vector<256x128xbf16>, vector<128x128xbf16>, vector<256x128xf32> -> vector<256x128xf32>
    %c0_4 = arith.constant 0 : index
    %c0_5 = arith.constant 0 : index
    %4 = vector.load %arg4[%c0_4, %c0_5] : memref<1x128xf32, #tpu.memory_space<vmem>>, vector<1x128xf32>
    %5 = vector.broadcast %4 : vector<1x128xf32> to vector<256x128xf32>
    %6 = arith.addf %3, %5 : vector<256x128xf32>
    %7 = arith.truncf %6 : vector<256x128xf32> to vector<256x128xbf16>
    %c0_6 = arith.constant 0 : index
    %c0_7 = arith.constant 0 : index
    %c0_8 = arith.constant 0 : index
    %8 = vector.load %arg5[%c0_6, %c0_7, %c0_8] : memref<1x256x128xbf16, #tpu.memory_space<vmem>>, vector<1x256x128xbf16>
    %9 = vector.shape_cast %8 : vector<1x256x128xbf16> to vector<256x128xbf16>
    %10 = vector.shape_cast %7 : vector<256x128xbf16> to vector<1x256x128xbf16>
    tpu.vector_store %arg5[%c0_6, %c0_7, %c0_8], %10 {strides = array<i32>} : memref<1x256x128xbf16, #tpu.memory_space<vmem>>, vector<1x256x128xbf16>,
    return
  }
  func.func @transform_0(%arg0: i32, %arg1: i32) -> (i32, i32, i32) {
    %c0_i32 = arith.constant 0 : i32
    %c0_i32_0 = arith.constant 0 : i32
    return %arg0, %arg1, %c0_i32 : i32, i32, i32
  }
  func.func @transform_1(%arg0: i32, %arg1: i32) -> (i32, i32) {
    %c0_i32 = arith.constant 0 : i32
    %c0_i32_0 = arith.constant 0 : i32
    %c0_i32_1 = arith.constant 0 : i32
    return %c0_i32, %c0_i32_0 : i32, i32
  }
  func.func @transform_2(%arg0: i32, %arg1: i32) -> (i32, i32) {
    %c0_i32 = arith.constant 0 : i32
    %c0_i32_0 = arith.constant 0 : i32
    %c0_i32_1 = arith.constant 0 : i32
    return %c0_i32, %c0_i32_0 : i32, i32
  }
  func.func @transform_3(%arg0: i32, %arg1: i32) -> (i32, i32, i32) {
    %c0_i32 = arith.constant 0 : i32
    %c0_i32_0 = arith.constant 0 : i32
    return %arg0, %arg1, %c0_i32 : i32, i32, i32
  }
}

</mosaic_0001>

<llo_original>
// kernel: tpu_custom_call.1
$region0: #{tpu_custom_call.1}
  #allocation0 [shape = 'u32[]', space=smem, size = 0x4, offset = 0x4, fixed_abs, tag = 'smem constant byte address 0x4 - core index']
  #allocation1 [shape = 'u32[72,128]{1,0:T(1,128)}', space=vmem, size = 0x9000, scoped, tag = 'internal scratch']
  %s0 = inlined_call_operand.hbm [shape: bf16[2,256,128], index: 0, kind: input, shape index: {}]
  %s1 = inlined_call_operand.hbm [shape: bf16[128,128], index: 1, kind: input, shape index: {}]
  %s2 = inlined_call_operand.vmem [shape: f32[1,128], index: 2, kind: input, shape index: {}]
  %s3 = inlined_call_operand.hbm [shape: bf16[2,256,128], index: 3, kind: output, shape index: {}]
  %s4 = sld [smem:[#allocation0]]
  $region53: #{tpu_custom_call.1} parent=0
    _
  %s6 = ssub.s32 1, %s4
  %s7 = scalar_select 0, %s6, %s4
  $region1: #{tpu_custom_call.1} parent=0
    #allocation2 [shape = 'u8[131072]{0}', space=vmem, size = 0x20000, scoped, tag = 'input window, operand 0']
    #allocation3 [shape = 's32[2]{0}', space=sflag, size = 0x8, scoped, tag = 'scoped memory for tpu_custom_call.1']
    #allocation4 [shape = 's32[2]{0}', space=sflag, size = 0x8, scoped, tag = 'scoped memory for tpu_custom_call.1']
    #allocation5 [shape = 'u8[32768]{0}', space=vmem, size = 0x8000, scoped, tag = 'input window, operand 1, single buffered']
    #allocation6 [shape = 's32[1]{0}', space=sflag, size = 0x4, scoped, tag = 'scoped memory for tpu_custom_call.1']
    #allocation7 [shape = 'u8[131072]{0}', space=vmem, size = 0x20000, scoped, tag = 'output window, operand 0']
    %8 = vsyncpa [#allocation3], 0
    %s9 = scalar_lea.sflag [#allocation3], 1
    %10 = vsyncpa %s9, 0
    %11 = vsyncpa [#allocation6], 0
    %12 = vsyncpa [#allocation4], 0
    %s13 = scalar_lea.sflag [#allocation4], 1
    %14 = vsyncpa %s13, 0
    loop: start=0, step=1, limit=4
    $region2: #{tpu_custom_call.1} parent=1 // loop_pre_header
      _
    $region3: #{tpu_custom_call.1} parent=1 // loop_header
      %s16 = sphi 0, %s20
      %p17 = scmp.ge.s32.totalorder %s16, 4
      %s23 = sphi 0, %s35
      %s24 = sphi 0, %s31
      %s25 = sphi 0, %s23
      %s26 = sphi 0, %s24
      %s27 = sphi 0, %s25
      %s28 = sphi 0, %s26
      %s40 = sphi 0, %s42
      %s43 = sphi 0, %s40
      %s44 = sphi 0, %s43
      %s60 = sphi 0, %s44
      %s64 = sphi 0, %s64
      %s66 = sphi 0, %s64
      %s67 = sphi 0, %s66
      %s81 = sphi 0, %s67
      %s85 = sphi 0, %s85
      %s87 = sphi 0, %s85
      %s88 = sphi 0, %s87
      %s102 = sphi 0, %s88
      %s110 = sphi 0, %s112
      %s113 = sphi 0, %s110
      %s114 = sphi 0, %s113
      %s130 = sphi 0, %s114
    $region4: #{tpu_custom_call.1} parent=1 // loop_header_branch
      %19 = sbr.rel (%p17) target = $region8
    $region5: #{tpu_custom_call.1} parent=1 // loop_body
      %s21 = ssub.s32 %s16, 1
      %s22 = ssub.s32 %s16, 2
      %s29 = sadd.s32 1, %s24
      %p30 = scmp.ge.s32.totalorder %s29, 1
      %s31 = scalar_select %p30, 0, %s29
      %s32 = sadd.s32 1, %s23
      %s33 = scalar_select %p30, %s32, %s23
      %p34 = scmp.ge.s32.totalorder %s33, 2
      %s35 = scalar_select %p34, 0, %s33
      %s36 = ssub.s32 %s23, %s35
      %s37 = ssub.s32 %s24, %s31
      %s38 = sor.u32 %s36, %s37
      %p39 = scmp.eq.s32.totalorder %s38, 0
      %s41 = sadd.s32 %s40, 1
      %s42 = scalar_select %p39, %s40, %s41
      %p45 = pneg %p39
      %p46 = scmp.eq.s32.totalorder %s16, 1
      %p47 = por %p45, %p46
      %p48 = scmp.ne.s32.totalorder %s40, %s43
      %p49 = scmp.eq.s32.totalorder %s16, 0
      %p50 = por %p48, %p49
      %p51 = scmp.ne.s32.totalorder %s40, %s43
      %p52 = scmp.eq.s32.totalorder %s21, 1
      %p53 = por %p51, %p52
      %p54 = scmp.ne.s32.totalorder %s43, %s44
      %p55 = scmp.eq.s32.totalorder %s21, 0
      %p56 = por %p54, %p55
      %p57 = scmp.ne.s32.totalorder %s43, %s44
      %p58 = scmp.eq.s32.totalorder %s22, 1
      %p59 = por %p57, %p58
      %p61 = scmp.ne.s32.totalorder %s44, %s60
      %p62 = scmp.eq.s32.totalorder %s22, 0
      %p63 = por %p61, %p62
      %s65 = sadd.s32 %s64, 1
      %p68 = scmp.eq.s32.totalorder %s16, 1
      %p69 = scmp.ne.s32.totalorder %s64, %s66
      %p70 = scmp.eq.s32.totalorder %s16, 0
      %p71 = por %p69, %p70
      %p72 = scmp.ne.s32.totalorder %s64, %s66
      %p73 = scmp.eq.s32.totalorder %s21, 1
      %p74 = por %p72, %p73
      %p75 = scmp.ne.s32.totalorder %s66, %s67
      %p76 = scmp.eq.s32.totalorder %s21, 0
      %p77 = por %p75, %p76
      %p78 = scmp.ne.s32.totalorder %s66, %s67
      %p79 = scmp.eq.s32.totalorder %s22, 1
      %p80 = por %p78, %p79
      %p82 = scmp.ne.s32.totalorder %s67, %s81
      %p83 = scmp.eq.s32.totalorder %s22, 0
      %p84 = por %p82, %p83
      %s86 = sadd.s32 %s85, 1
      %p89 = scmp.eq.s32.totalorder %s16, 1
      %p90 = scmp.ne.s32.totalorder %s85, %s87
      %p91 = scmp.eq.s32.totalorder %s16, 0
      %p92 = por %p90, %p91
      %p93 = scmp.ne.s32.totalorder %s85, %s87
      %p94 = scmp.eq.s32.totalorder %s21, 1
      %p95 = por %p93, %p94
      %p96 = scmp.ne.s32.totalorder %s87, %s88
      %p97 = scmp.eq.s32.totalorder %s21, 0
      %p98 = por %p96, %p97
      %p99 = scmp.ne.s32.totalorder %s87, %s88
      %p100 = scmp.eq.s32.totalorder %s22, 1
      %p101 = por %p99, %p100
      %p103 = scmp.ne.s32.totalorder %s88, %s102
      %p104 = scmp.eq.s32.totalorder %s22, 0
      %p105 = por %p103, %p104
      %s106 = ssub.s32 %s23, %s35
      %s107 = ssub.s32 %s24, %s31
      %s108 = sor.u32 %s106, %s107
      %p109 = scmp.eq.s32.totalorder %s108, 0
      %s111 = sadd.s32 %s110, 1
      %s112 = scalar_select %p109, %s110, %s111
      %p115 = pneg %p109
      %p116 = scmp.eq.s32.totalorder %s16, 1
      %p117 = por %p115, %p116
      %p118 = scmp.ne.s32.totalorder %s110, %s113
      %p119 = scmp.eq.s32.totalorder %s16, 0
      %p120 = por %p118, %p119
      %p121 = scmp.ne.s32.totalorder %s110, %s113
      %p122 = scmp.eq.s32.totalorder %s21, 1
      %p123 = por %p121, %p122
      %p124 = scmp.ne.s32.totalorder %s113, %s114
      %p125 = scmp.eq.s32.totalorder %s21, 0
      %p126 = por %p124, %p125
      %p127 = scmp.ne.s32.totalorder %s113, %s114
      %p128 = scmp.eq.s32.totalorder %s22, 1
      %p129 = por %p127, %p128
      %p131 = scmp.ne.s32.totalorder %s114, %s130
      %p132 = scmp.eq.s32.totalorder %s22, 0
      %p133 = por %p131, %p132
      %p134 = scmp.le.s32.totalorder 1, %s16
      %p135 = scmp.lt.s32.totalorder %s16, 3
      %p136 = pnand %p134, %p135
      %p137 = pneg %p136
      // Predicated region
      $region9: #{tpu_custom_call.1} parent=5 // pred_check
        _
      $region10: #{tpu_custom_call.1} parent=5 // pred_check_branch
        %139 = sbr.rel (%p136) target = $region12
      $region11: #{tpu_custom_call.1} parent=5 // pred_region
        %s140 = ssub.s32 %s16, 1
        // Predicated region
        $region13: #{tpu_custom_call.1} parent=11 // pred_check
          %p141 = pneg %p77
        $region14: #{tpu_custom_call.1} parent=11 // pred_check_branch
          %143 = sbr.rel (%p141) target = $region16
        $region15: #{tpu_custom_call.1} parent=11 // pred_region
          %145 = vsyncadd [#allocation6], 0
          %s146 = sshll.u32 %s1, 4
          %s147 = int_to_ptr.hbm [resolvable:$true] %s146
          %s148 = sshll.u32 [#allocation5], 4
          %s149 = int_to_ptr.vmem [resolvable:$true] %s148
          %154 = dma.hbm_to_vmem [thread:$0]  %s147, 1024, %s149, [#allocation6], 64, 64, 4
        $region16: #{tpu_custom_call.1} parent=11 // pred_fallthru
          _
        // Predicated region
        $region17: #{tpu_custom_call.1} parent=11 // pred_check
          %p155 = pneg %p98
        $region18: #{tpu_custom_call.1} parent=11 // pred_check_branch
          %157 = sbr.rel (%p155) target = $region20
        $region19: #{tpu_custom_call.1} parent=11 // pred_region
          _
        $region20: #{tpu_custom_call.1} parent=11 // pred_fallthru
          _
      $region12: #{tpu_custom_call.1} parent=5 // pred_fallthru
        _
      %p158 = scmp.lt.s32.totalorder %s16, 2
      // Predicated region
      $region21: #{tpu_custom_call.1} parent=5 // pred_check
        %p159 = pneg %p158
      $region22: #{tpu_custom_call.1} parent=5 // pred_check_branch
        %161 = sbr.rel (%p159) target = $region24
      $region23: #{tpu_custom_call.1} parent=5 // pred_region
        // Predicated region
        $region25: #{tpu_custom_call.1} parent=23 // pred_check
          %p162 = pneg %p50
        $region26: #{tpu_custom_call.1} parent=23 // pred_check_branch
          %164 = sbr.rel (%p162) target = $region28
        $region27: #{tpu_custom_call.1} parent=23 // pred_region
          %s165 = sand.u32 %s40, 1
          %s166 = scalar_lea.sflag [#allocation3], %s165
          %s167 = sand.u32 %s40, 1
          %s168 = smul.addr %s167, 128
          %s169 = scalar_lea.vmem [#allocation2], %s168
          %s170 = smul.u32 32, %s24
          %172 = vsyncadd %s166, 0
          %s173 = smul.addr %s23, 32
          %s174 = sadd.s32 %s170, %s173
          %s175 = smul.addr %s174, 4
          %s176 = scalar_lea.hbm %s0, %s175
          %s177 = sshll.u32 %s176, 4
          %s178 = int_to_ptr.hbm [resolvable:$true] %s177
          %s179 = sshll.u32 %s169, 4
          %s180 = int_to_ptr.vmem [resolvable:$true] %s179
          %185 = dma.hbm_to_vmem [thread:$0]  %s178, 2048, %s180, %s166, 64, 64, 4
        $region28: #{tpu_custom_call.1} parent=23 // pred_fallthru
          _
      $region24: #{tpu_custom_call.1} parent=5 // pred_fallthru
        _
      %p186 = scmp.le.s32.totalorder 1, %s16
      %p187 = scmp.lt.s32.totalorder %s16, 3
      %p188 = pnand %p186, %p187
      %p189 = pneg %p188
      // Predicated region
      $region29: #{tpu_custom_call.1} parent=5 // pred_check
        _
      $region30: #{tpu_custom_call.1} parent=5 // pred_check_branch
        %191 = sbr.rel (%p188) target = $region32
      $region31: #{tpu_custom_call.1} parent=5 // pred_region
        %s192 = ssub.s32 %s16, 1
        %s193 = sand.u32 %s43, 1
        %s194 = scalar_lea.sflag [#allocation3], %s193
        %s195 = sand.u32 %s43, 1
        %s196 = smul.addr %s195, 128
        %s197 = scalar_lea.vmem [#allocation2], %s196
        // Predicated region
        $region33: #{tpu_custom_call.1} parent=31 // pred_check
          %p198 = pneg %p56
        $region34: #{tpu_custom_call.1} parent=31 // pred_check_branch
          %200 = sbr.rel (%p198) target = $region36
        $region35: #{tpu_custom_call.1} parent=31 // pred_region
          %202 = dma.done %s194, 2048
        $region36: #{tpu_custom_call.1} parent=31 // pred_fallthru
          _
        // Predicated region
        $region37: #{tpu_custom_call.1} parent=31 // pred_check
          %p203 = pneg %p77
        $region38: #{tpu_custom_call.1} parent=31 // pred_check_branch
          %205 = sbr.rel (%p203) target = $region40
        $region39: #{tpu_custom_call.1} parent=31 // pred_region
          %207 = dma.done [#allocation6], 1024
        $region40: #{tpu_custom_call.1} parent=31 // pred_fallthru
          _
        %s208 = sand.u32 %s43, 1
        %s209 = scalar_lea.sflag [#allocation3], %s208
        %s210 = sand.u32 %s43, 1
        %s211 = smul.addr %s210, 128
        %s212 = scalar_lea.vmem [#allocation2], %s211
        %p213 = pneg %p56
        %p214 = pneg %p53
        %p215 = pneg %p77
        %p216 = pneg %p74
        %p217 = pneg %p98
        %p218 = pneg %p95
        %p219 = pneg %p126
        %p220 = pneg %p123
        %s221 = sand.u32 %s113, 1
        %s222 = scalar_lea.sflag [#allocation4], %s221
        %s223 = sand.u32 %s113, 1
        %s224 = smul.addr %s223, 128
        %s225 = scalar_lea.vmem [#allocation7], %s224
        %s226 = smul.u32 32, %s26
        %s227 = smul.u32 32, %s26
        %v228 = vld [vmem:[%s197] sm:$0xf]
        %v229 = vld [vmem:[%s197 + $0x4] sm:$0xf]
        %v230 = vld [vmem:[%s197 + $0x8] sm:$0xf]
        %v231 = vld [vmem:[%s197 + $0xc] sm:$0xf]
        %v232 = vld [vmem:[%s197 + $0x10] sm:$0xf]
        %v233 = vld [vmem:[%s197 + $0x14] sm:$0xf]
        %v234 = vld [vmem:[%s197 + $0x18] sm:$0xf]
        %v235 = vld [vmem:[%s197 + $0x1c] sm:$0xf]
        %v236 = vld [vmem:[%s197 + $0x20] sm:$0xf]
        %v237 = vld [vmem:[%s197 + $0x24] sm:$0xf]
        %v238 = vld [vmem:[%s197 + $0x28] sm:$0xf]
        %v239 = vld [vmem:[%s197 + $0x2c] sm:$0xf]
        %v240 = vld [vmem:[%s197 + $0x30] sm:$0xf]
        %v241 = vld [vmem:[%s197 + $0x34] sm:$0xf]
        %v242 = vld [vmem:[%s197 + $0x38] sm:$0xf]
        %v243 = vld [vmem:[%s197 + $0x3c] sm:$0xf]
        %v244 = vld [vmem:[%s197 + $0x40] sm:$0xf]
        %v245 = vld [vmem:[%s197 + $0x44] sm:$0xf]
        %v246 = vld [vmem:[%s197 + $0x48] sm:$0xf]
        %v247 = vld [vmem:[%s197 + $0x4c] sm:$0xf]
        %v248 = vld [vmem:[%s197 + $0x50] sm:$0xf]
        %v249 = vld [vmem:[%s197 + $0x54] sm:$0xf]
        %v250 = vld [vmem:[%s197 + $0x58] sm:$0xf]
        %v251 = vld [vmem:[%s197 + $0x5c] sm:$0xf]
        %v252 = vld [vmem:[%s197 + $0x60] sm:$0xf]
        %v253 = vld [vmem:[%s197 + $0x64] sm:$0xf]
        %v254 = vld [vmem:[%s197 + $0x68] sm:$0xf]
        %v255 = vld [vmem:[%s197 + $0x6c] sm:$0xf]
        %v256 = vld [vmem:[%s197 + $0x70] sm:$0xf]
        %v257 = vld [vmem:[%s197 + $0x74] sm:$0xf]
        %v258 = vld [vmem:[%s197 + $0x78] sm:$0xf]
        %v259 = vld [vmem:[%s197 + $0x7c] sm:$0xf]
        %v260 = vld [vmem:[#allocation5] sm:$0xf]
        %v261 = vld [vmem:[#allocation5 + $0x4] sm:$0xf]
        %v262 = vld [vmem:[#allocation5 + $0x8] sm:$0xf]
        %v263 = vld [vmem:[#allocation5 + $0xc] sm:$0xf]
        %v264 = vld [vmem:[#allocation5 + $0x10] sm:$0xf]
        %v265 = vld [vmem:[#allocation5 + $0x14] sm:$0xf]
        %v266 = vld [vmem:[#allocation5 + $0x18] sm:$0xf]
        %v267 = vld [vmem:[#allocation5 + $0x1c] sm:$0xf]
        %v268 = vld [vmem:[#allocation5 + $0x20] sm:$0xf]
        %v269 = vld [vmem:[#allocation5 + $0x24] sm:$0xf]
        %v270 = vld [vmem:[#allocation5 + $0x28] sm:$0xf]
        %v271 = vld [vmem:[#allocation5 + $0x2c] sm:$0xf]
        %v272 = vld [vmem:[#allocation5 + $0x30] sm:$0xf]
        %v273 = vld [vmem:[#allocation5 + $0x34] sm:$0xf]
        %v274 = vld [vmem:[#allocation5 + $0x38] sm:$0xf]
        %v275 = vld [vmem:[#allocation5 + $0x3c] sm:$0xf]
        %v276 = vld [vmem:[%s2] sm:$0x1]
        %v278 = vperm.slane %v276, 0
        %v312 = vunpack.c.l.b16 %v228
        %v313 = vunpack.c.l.b16 %v229
        %v314 = vunpack.c.l.b16 %v230
        %v315 = vunpack.c.l.b16 %v231
        %v316 = vunpack.c.l.b16 %v232
        %v317 = vunpack.c.l.b16 %v233
        %v318 = vunpack.c.l.b16 %v234
        %v319 = vunpack.c.l.b16 %v235
        %v320 = vunpack.c.l.b16 %v236
        %v321 = vunpack.c.l.b16 %v237
        %v322 = vunpack.c.l.b16 %v238
        %v323 = vunpack.c.l.b16 %v239
        %v324 = vunpack.c.l.b16 %v240
        %v325 = vunpack.c.l.b16 %v241
        %v326 = vunpack.c.l.b16 %v242
        %v327 = vunpack.c.l.b16 %v243
        %v328 = vunpack.c.l.b16 %v244
        %v329 = vunpack.c.l.b16 %v245
        %v330 = vunpack.c.l.b16 %v246
        %v331 = vunpack.c.l.b16 %v247
        %v332 = vunpack.c.l.b16 %v248
        %v333 = vunpack.c.l.b16 %v249
        %v334 = vunpack.c.l.b16 %v250
        %v335 = vunpack.c.l.b16 %v251
        %v336 = vunpack.c.l.b16 %v252
        %v337 = vunpack.c.l.b16 %v253
        %v338 = vunpack.c.l.b16 %v254
        %v339 = vunpack.c.l.b16 %v255
        %v340 = vunpack.c.l.b16 %v256
        %v341 = vunpack.c.l.b16 %v257
        %v342 = vunpack.c.l.b16 %v258
        %v343 = vunpack.c.l.b16 %v259
        %v344 = vpack.c.b16 %v313, %v312
        %v345 = vpack.c.b16 %v315, %v314
        %v346 = vpack.c.b16 %v317, %v316
        %v347 = vpack.c.b16 %v319, %v318
        %v348 = vpack.c.b16 %v321, %v320
        %v349 = vpack.c.b16 %v323, %v322
        %v350 = vpack.c.b16 %v325, %v324
        %v351 = vpack.c.b16 %v327, %v326
        %v352 = vpack.c.b16 %v329, %v328
        %v353 = vpack.c.b16 %v331, %v330
        %v354 = vpack.c.b16 %v333, %v332
        %v355 = vpack.c.b16 %v335, %v334
        %v356 = vpack.c.b16 %v337, %v336
        %v357 = vpack.c.b16 %v339, %v338
        %v358 = vpack.c.b16 %v341, %v340
        %v359 = vpack.c.b16 %v343, %v342
        %v392 = vunpack.c.l.b16 %v260
        %v393 = vunpack.c.l.b16 %v261
        %v394 = vunpack.c.l.b16 %v262
        %v395 = vunpack.c.l.b16 %v263
        %v396 = vunpack.c.l.b16 %v264
        %v397 = vunpack.c.l.b16 %v265
        %v398 = vunpack.c.l.b16 %v266
        %v399 = vunpack.c.l.b16 %v267
        %v400 = vunpack.c.l.b16 %v268
        %v401 = vunpack.c.l.b16 %v269
        %v402 = vunpack.c.l.b16 %v270
        %v403 = vunpack.c.l.b16 %v271
        %v404 = vunpack.c.l.b16 %v272
        %v405 = vunpack.c.l.b16 %v273
        %v406 = vunpack.c.l.b16 %v274
        %v407 = vunpack.c.l.b16 %v275
        %v408 = vpack.c.b16 %v393, %v392
        %v409 = vpack.c.b16 %v395, %v394
        %v410 = vpack.c.b16 %v397, %v396
        %v411 = vpack.c.b16 %v399, %v398
        %v412 = vpack.c.b16 %v401, %v400
        %v413 = vpack.c.b16 %v403, %v402
        %v414 = vpack.c.b16 %v405, %v404
        %v415 = vpack.c.b16 %v407, %v406
        %424 = vmatpush.bf16.msra.mxu0 %v415
        %425 = vmatpush.bf16.msra.mxu0 %v414
        %426 = vmatpush.bf16.msra.mxu0 %v413
        %427 = vmatpush.bf16.msra.mxu0 %v412
        %428 = vmatpush.bf16.msra.mxu0 %v411
        %429 = vmatpush.bf16.msra.mxu0 %v410
        %430 = vmatpush.bf16.msra.mxu0 %v409
        %431 = vmatpush.bf16.msra.mxu0 %v408
        %432 = vmatmul.bf16.gmra.mxu0 %v344
        %v433 = vpop.f32.mrf.mxu0
        %v434 = vadd.f32 %v278, %v433
        %v435 = vpop.f32.mrf.mxu0
        %v436 = vadd.f32 %v278, %v435
        %437 = vmatmul.bf16.gmra.mxu0 %v345
        %v438 = vpop.f32.mrf.mxu0
        %v439 = vadd.f32 %v278, %v438
        %v440 = vpop.f32.mrf.mxu0
        %v441 = vadd.f32 %v278, %v440
        %442 = vmatmul.bf16.gmra.mxu0 %v346
        %v443 = vpop.f32.mrf.mxu0
        %v444 = vadd.f32 %v278, %v443
        %v445 = vpop.f32.mrf.mxu0
        %v446 = vadd.f32 %v278, %v445
        %447 = vmatmul.bf16.gmra.mxu0 %v347
        %v448 = vpop.f32.mrf.mxu0
        %v449 = vadd.f32 %v278, %v448
        %v450 = vpop.f32.mrf.mxu0
        %v451 = vadd.f32 %v278, %v450
        %452 = vmatmul.bf16.gmra.mxu0 %v348
        %v453 = vpop.f32.mrf.mxu0
        %v454 = vadd.f32 %v278, %v453
        %v455 = vpop.f32.mrf.mxu0
        %v456 = vadd.f32 %v278, %v455
        %457 = vmatmul.bf16.gmra.mxu0 %v349
        %v458 = vpop.f32.mrf.mxu0
        %v459 = vadd.f32 %v278, %v458
        %v460 = vpop.f32.mrf.mxu0
        %v461 = vadd.f32 %v278, %v460
        %462 = vmatmul.bf16.gmra.mxu0 %v350
        %v463 = vpop.f32.mrf.mxu0
        %v464 = vadd.f32 %v278, %v463
        %v465 = vpop.f32.mrf.mxu0
        %v466 = vadd.f32 %v278, %v465
        %467 = vmatmul.bf16.gmra.mxu0 %v351
        %v468 = vpop.f32.mrf.mxu0
        %v469 = vadd.f32 %v278, %v468
        %v470 = vpop.f32.mrf.mxu0
        %v471 = vadd.f32 %v278, %v470
        %472 = vmatmul.bf16.gmra.mxu0 %v352
        %v473 = vpop.f32.mrf.mxu0
        %v474 = vadd.f32 %v278, %v473
        %v475 = vpop.f32.mrf.mxu0
        %v476 = vadd.f32 %v278, %v475
        %477 = vmatmul.bf16.gmra.mxu0 %v353
        %v478 = vpop.f32.mrf.mxu0
        %v479 = vadd.f32 %v278, %v478
        %v480 = vpop.f32.mrf.mxu0
        %v481 = vadd.f32 %v278, %v480
        %482 = vmatmul.bf16.gmra.mxu0 %v354
        %v483 = vpop.f32.mrf.mxu0
        %v484 = vadd.f32 %v278, %v483
        %v485 = vpop.f32.mrf.mxu0
        %v486 = vadd.f32 %v278, %v485
        %487 = vmatmul.bf16.gmra.mxu0 %v355
        %v488 = vpop.f32.mrf.mxu0
        %v489 = vadd.f32 %v278, %v488
        %v490 = vpop.f32.mrf.mxu0
        %v491 = vadd.f32 %v278, %v490
        %492 = vmatmul.bf16.gmra.mxu0 %v356
        %v493 = vpop.f32.mrf.mxu0
        %v494 = vadd.f32 %v278, %v493
        %v495 = vpop.f32.mrf.mxu0
        %v496 = vadd.f32 %v278, %v495
        %497 = vmatmul.bf16.gmra.mxu0 %v357
        %v498 = vpop.f32.mrf.mxu0
        %v499 = vadd.f32 %v278, %v498
        %v500 = vpop.f32.mrf.mxu0
        %v501 = vadd.f32 %v278, %v500
        %502 = vmatmul.bf16.gmra.mxu0 %v358
        %v503 = vpop.f32.mrf.mxu0
        %v504 = vadd.f32 %v278, %v503
        %v505 = vpop.f32.mrf.mxu0
        %v506 = vadd.f32 %v278, %v505
        %507 = vmatmul.bf16.gmra.mxu0 %v359
        %v508 = vpop.f32.mrf.mxu0
        %v509 = vadd.f32 %v278, %v508
        %v510 = vpop.f32.mrf.mxu0
        %v511 = vadd.f32 %v278, %v510
        %512 = vdwg.mxu0
        %v513 = vpack.c.bf16 %v434, %v434
        %v514 = vpack.c.bf16 %v436, %v436
        %v515 = vpack.c.bf16 %v439, %v439
        %v516 = vpack.c.bf16 %v441, %v441
        %v517 = vpack.c.bf16 %v444, %v444
        %v518 = vpack.c.bf16 %v446, %v446
        %v519 = vpack.c.bf16 %v449, %v449
        %v520 = vpack.c.bf16 %v451, %v451
        %v521 = vpack.c.bf16 %v454, %v454
        %v522 = vpack.c.bf16 %v456, %v456
        %v523 = vpack.c.bf16 %v459, %v459
        %v524 = vpack.c.bf16 %v461, %v461
        %v525 = vpack.c.bf16 %v464, %v464
        %v526 = vpack.c.bf16 %v466, %v466
        %v527 = vpack.c.bf16 %v469, %v469
        %v528 = vpack.c.bf16 %v471, %v471
        %v529 = vpack.c.bf16 %v474, %v474
        %v530 = vpack.c.bf16 %v476, %v476
        %v531 = vpack.c.bf16 %v479, %v479
        %v532 = vpack.c.bf16 %v481, %v481
        %v533 = vpack.c.bf16 %v484, %v484
        %v534 = vpack.c.bf16 %v486, %v486
        %v535 = vpack.c.bf16 %v489, %v489
        %v536 = vpack.c.bf16 %v491, %v491
        %v537 = vpack.c.bf16 %v494, %v494
        %v538 = vpack.c.bf16 %v496, %v496
        %v539 = vpack.c.bf16 %v499, %v499
        %v540 = vpack.c.bf16 %v501, %v501
        %v541 = vpack.c.bf16 %v504, %v504
        %v542 = vpack.c.bf16 %v506, %v506
        %v543 = vpack.c.bf16 %v509, %v509
        %v544 = vpack.c.bf16 %v511, %v511
        %545 = vst [vmem:[%s225] sm:$0xf] %v513
        %546 = vst [vmem:[%s225 + $0x4] sm:$0xf] %v514
        %547 = vst [vmem:[%s225 + $0x8] sm:$0xf] %v515
        %548 = vst [vmem:[%s225 + $0xc] sm:$0xf] %v516
        %549 = vst [vmem:[%s225 + $0x10] sm:$0xf] %v517
        %550 = vst [vmem:[%s225 + $0x14] sm:$0xf] %v518
        %551 = vst [vmem:[%s225 + $0x18] sm:$0xf] %v519
        %552 = vst [vmem:[%s225 + $0x1c] sm:$0xf] %v520
        %553 = vst [vmem:[%s225 + $0x20] sm:$0xf] %v521
        %554 = vst [vmem:[%s225 + $0x24] sm:$0xf] %v522
        %555 = vst [vmem:[%s225 + $0x28] sm:$0xf] %v523
        %556 = vst [vmem:[%s225 + $0x2c] sm:$0xf] %v524
        %557 = vst [vmem:[%s225 + $0x30] sm:$0xf] %v525
        %558 = vst [vmem:[%s225 + $0x34] sm:$0xf] %v526
        %559 = vst [vmem:[%s225 + $0x38] sm:$0xf] %v527
        %560 = vst [vmem:[%s225 + $0x3c] sm:$0xf] %v528
        %561 = vst [vmem:[%s225 + $0x40] sm:$0xf] %v529
        %562 = vst [vmem:[%s225 + $0x44] sm:$0xf] %v530
        %563 = vst [vmem:[%s225 + $0x48] sm:$0xf] %v531
        %564 = vst [vmem:[%s225 + $0x4c] sm:$0xf] %v532
        %565 = vst [vmem:[%s225 + $0x50] sm:$0xf] %v533
        %566 = vst [vmem:[%s225 + $0x54] sm:$0xf] %v534
        %567 = vst [vmem:[%s225 + $0x58] sm:$0xf] %v535
        %568 = vst [vmem:[%s225 + $0x5c] sm:$0xf] %v536
        %569 = vst [vmem:[%s225 + $0x60] sm:$0xf] %v537
        %570 = vst [vmem:[%s225 + $0x64] sm:$0xf] %v538
        %571 = vst [vmem:[%s225 + $0x68] sm:$0xf] %v539
        %572 = vst [vmem:[%s225 + $0x6c] sm:$0xf] %v540
        %573 = vst [vmem:[%s225 + $0x70] sm:$0xf] %v541
        %574 = vst [vmem:[%s225 + $0x74] sm:$0xf] %v542
        %575 = vst [vmem:[%s225 + $0x78] sm:$0xf] %v543
        %576 = vst [vmem:[%s225 + $0x7c] sm:$0xf] %v544
        %s577 = sand.u32 %s113, 1
        %s578 = scalar_lea.sflag [#allocation4], %s577
        %s579 = sand.u32 %s113, 1
        %s580 = smul.addr %s579, 128
        %s581 = scalar_lea.vmem [#allocation7], %s580
        // Predicated region
        $region41: #{tpu_custom_call.1} parent=31 // pred_check
          %p582 = pneg %p123
        $region42: #{tpu_custom_call.1} parent=31 // pred_check_branch
          %584 = sbr.rel (%p582) target = $region44
        $region43: #{tpu_custom_call.1} parent=31 // pred_region
          %s585 = smul.u32 32, %s26
          %587 = vsyncadd %s578, 0
          %s588 = smul.addr %s25, 32
          %s589 = sadd.s32 %s585, %s588
          %s590 = smul.addr %s589, 4
          %s591 = scalar_lea.hbm %s3, %s590
          %s592 = sshll.u32 %s581, 4
          %s593 = int_to_ptr.vmem [resolvable:$true] %s592
          %s594 = sshll.u32 %s591, 4
          %s595 = int_to_ptr.hbm [resolvable:$true] %s594
          %600 = dma.vmem_to_hbm [thread:$0]  %s593, 2048, %s595, %s578, 64, 64, 4
        $region44: #{tpu_custom_call.1} parent=31 // pred_fallthru
          _
      $region32: #{tpu_custom_call.1} parent=5 // pred_fallthru
        _
      %p601 = scmp.le.s32.totalorder 2, %s16
      // Predicated region
      $region45: #{tpu_custom_call.1} parent=5 // pred_check
        %p602 = pneg %p601
      $region46: #{tpu_custom_call.1} parent=5 // pred_check_branch
        %604 = sbr.rel (%p602) target = $region48
      $region47: #{tpu_custom_call.1} parent=5 // pred_region
        %s605 = ssub.s32 %s16, 2
        // Predicated region
        $region49: #{tpu_custom_call.1} parent=47 // pred_check
          %p606 = pneg %p129
        $region50: #{tpu_custom_call.1} parent=47 // pred_check_branch
          %608 = sbr.rel (%p606) target = $region52
        $region51: #{tpu_custom_call.1} parent=47 // pred_region
          %s609 = sand.u32 %s114, 1
          %s610 = scalar_lea.sflag [#allocation4], %s609
          %s611 = sand.u32 %s114, 1
          %s612 = smul.addr %s611, 128
          %s613 = scalar_lea.vmem [#allocation7], %s612
          %615 = dma.done %s610, 2048
        $region52: #{tpu_custom_call.1} parent=47 // pred_fallthru
          _
      $region48: #{tpu_custom_call.1} parent=5 // pred_fallthru
        _
    $region6: #{tpu_custom_call.1} parent=1 // loop_footer
      %s20 = sadd.s32 1, %s16
    $region7: #{tpu_custom_call.1} parent=1 // loop_footer_branch
      %15 = sbr.rel target = $region3
    $region8: #{tpu_custom_call.1} parent=1 // loop_exit
      _
    %616 = vsyncpa [#allocation3], 1
    %s617 = scalar_lea.sflag [#allocation3], 1
    %618 = vsyncpa %s617, 1
    %619 = vsyncpa [#allocation6], 1
    %620 = vsyncpa [#allocation4], 1
    %s621 = scalar_lea.sflag [#allocation4], 1
    %622 = vsyncpa %s621, 1

</llo_original>
